<compile_context>
chip_gen: v5e
topology: v5e:2x2
jax: 0.10.0
libtpu: 0.0.40
codegen_flags: <defaults>
</compile_context>

<pallas_src>
import functools

import jax
import jax.numpy as jnp
from jax import lax
from jax.experimental import pallas as pl
from jax.experimental.pallas import tpu as pltpu


def _prompt_kernel(name_len_ref, ctx1_ref, ctx2_ref, emb_ref, out_ref, *,
                   n_ctx1, n_ctx2, tc):
    """One grid step handles `tc` classes: one (tc, seq_len, ctx_dim) block."""
    base = pl.program_id(0) * tc

    # 1) Verbatim copy of the tc embedding rows (prefix/name/definition/suffix/padding).
    #    For the ragged last block the OOB rows are garbage in, discarded on writeback.
    out_ref[...] = emb_ref[...]

    # 2) ctx1 sits at the static token offset 1 for every class:
    #    single broadcast store for the whole block (one wide vst instead of tc stores).
    ctx_dim = ctx1_ref.shape[1]
    ctx1_b = jnp.broadcast_to(
        ctx1_ref[...].astype(out_ref.dtype)[None], (tc, n_ctx1, ctx_dim))
    out_ref[:, pl.ds(1, n_ctx1), :] = ctx1_b

    # 3) ctx2 sits at a per-class, data-dependent offset (depends on the tokenized
    #    class-name length, read from the SMEM scalar-prefetch table).
    #    One wide dynamic-slice store per class (no per-row unrolled stores).
    ctx2_b = ctx2_ref[...].astype(out_ref.dtype)[None]  # (1, n_ctx2, ctx_dim)

    def body(c, carry):
        start2 = 1 + n_ctx1 + name_len_ref[base + c]
        out_ref[pl.ds(c, 1), pl.ds(start2, n_ctx2), :] = ctx2_b
        return carry

    lax.fori_loop(0, tc, body, 0, unroll=True)


def prompt_learner_forward(ctx1, ctx2, embedding, name_lens, *,
                           block_classes=None, vmem_buffer_budget=24 << 20):
    """Pallas implementation of PromptLearner.forward().

    ctx1:      (n_ctx1, ctx_dim)  learnable context (shared across classes)
    ctx2:      (n_ctx2, ctx_dim)  learnable context (shared, per-class offset)
    embedding: (n_cls, seq_len, ctx_dim)  frozen CLIP token embeddings of the prompts
    name_lens: (n_cls,) int       tokenized class-name lengths
    returns:   (n_cls, seq_len, ctx_dim)
    """
    n_cls, seq_len, ctx_dim = embedding.shape
    n_ctx1 = ctx1.shape[0]
    n_ctx2 = ctx2.shape[0]
    assert seq_len >= 1 + n_ctx1 + n_ctx2, "sequence too short for the two contexts"

    # Guard: TPU VMEM stores have no runtime bounds check -> clamp the dynamic offset
    # so 1 + n_ctx1 + name_len + n_ctx2 <= seq_len always holds.
    max_name_len = seq_len - 1 - n_ctx1 - n_ctx2
    name_lens = jnp.clip(name_lens.astype(jnp.int32), 0, max_name_len)

    # Classes per grid step: double-buffered (in + out) blocks must fit a VMEM budget
    # that is conservative for every generation (v7x has only 64 MiB VMEM per TC).
    per_class_bytes = seq_len * ctx_dim * jnp.dtype(embedding.dtype).itemsize
    if block_classes is None:
        tc = max(1, min(64, vmem_buffer_budget // (4 * per_class_bytes), n_cls))
    else:
        tc = max(1, min(int(block_classes), n_cls))
    tc = int(tc)

    n_blocks = int(pl.cdiv(n_cls, tc))

    # Only the scalar table is padded (cheap); the padded tail gets name_len=0 so the
    # data-dependent ctx2 store for the garbage tail classes stays inside the block.
    n_cls_pad = n_blocks * tc
    if n_cls_pad != n_cls:
        name_lens = jnp.pad(name_lens, (0, n_cls_pad - n_cls))

    kernel = functools.partial(_prompt_kernel, n_ctx1=n_ctx1, n_ctx2=n_ctx2, tc=tc)

    out = pl.pallas_call(
        kernel,
        out_shape=jax.ShapeDtypeStruct((n_cls, seq_len, ctx_dim), embedding.dtype),
        grid_spec=pltpu.PrefetchScalarGridSpec(
            num_scalar_prefetch=1,                 # name_lens -> SMEM
            grid=(n_blocks,),
            in_specs=[
                pl.BlockSpec((n_ctx1, ctx_dim), lambda i, nl: (0, 0)),          # ctx1
                pl.BlockSpec((n_ctx2, ctx_dim), lambda i, nl: (0, 0)),          # ctx2
                pl.BlockSpec((tc, seq_len, ctx_dim), lambda i, nl: (i, 0, 0)),  # embedding
            ],
            out_specs=pl.BlockSpec((tc, seq_len, ctx_dim), lambda i, nl: (i, 0, 0)),
        ),
        compiler_params=pltpu.CompilerParams(
            dimension_semantics=("parallel",),     # classes are independent -> megacore
            vmem_limit_bytes=40 << 20,             # < 64 MiB so it is valid on v7x too
        ),
    )(name_lens, ctx1, ctx2, embedding)

    return out


def prompt_learner_reference(ctx1, ctx2, embedding, name_lens):
    """Pure-JAX mirror of the PyTorch forward (per-class slice + concat)."""
    n_cls = embedding.shape[0]
    n_ctx1 = ctx1.shape[0]
    n_ctx2 = ctx2.shape[0]
    c1 = ctx1.astype(embedding.dtype)[None]
    c2 = ctx2.astype(embedding.dtype)[None]
    prompts = []
    for i in range(n_cls):
        nl = int(name_lens[i])
        prefix_i = embedding[i:i + 1, :1, :]
        name_i = embedding[i:i + 1, 1 + n_ctx1:1 + n_ctx1 + nl, :]
        rest_i = embedding[i:i + 1, 1 + n_ctx1 + nl + n_ctx2:, :]
        prompts.append(jnp.concatenate([prefix_i, c1, name_i, c2, rest_i], axis=1))
    return jnp.concatenate(prompts, axis=0)


if __name__ == "__main__":
    # Small synthetic shapes consistent with the module: n_cls classes, CLIP-style
    # token sequence of length seq_len, ctx_dim features (lane-dense multiple of 128),
    # n_ctx learnable context tokens before the class name and before the definition.
    # TODO(synk): tokenization / CLIP token_embedding lookup happens in __init__ on the
    # host; only the forward (slice + concat assembly) is implemented as a kernel.
    n_cls, seq_len, ctx_dim = 10, 16, 128
    n_ctx = 2

    key = jax.random.PRNGKey(0)
    k1, k2, k3, k4 = jax.random.split(key, 4)

    # nn.init.normal_(std=0.02) equivalents for the learnable contexts.
    ctx1 = (0.02 * jax.random.normal(k1, (n_ctx, ctx_dim))).astype(jnp.float32)
    ctx2 = (0.02 * jax.random.normal(k2, (n_ctx, ctx_dim))).astype(jnp.float32)

    # Frozen CLIP token embedding of the tokenized prompts (synthetic, deterministic).
    embedding = jax.random.normal(k3, (n_cls, seq_len, ctx_dim)).astype(jnp.float32)

    # Tokenized class-name lengths; 1(SOS)+n_ctx+max(name_len)+n_ctx+... <= seq_len.
    name_lens = jax.random.randint(k4, (n_cls,), 1, 4).astype(jnp.int32)

    # Check 1: fp32, forced small class block (exercises multi-step grid + ragged tail:
    # grid=3, last block holds 2 valid + 2 out-of-bounds classes).
    out = prompt_learner_forward(ctx1, ctx2, embedding, name_lens, block_classes=4)
    out = jax.block_until_ready(out)
    ref = prompt_learner_reference(ctx1, ctx2, embedding, name_lens)
    assert out.shape == (n_cls, seq_len, ctx_dim)
    assert out.dtype == embedding.dtype
    assert jnp.allclose(out, ref), "Pallas output does not match reference (fp32)"

    # Check 2: bf16 embedding with fp32 learnable contexts (exercises in-kernel cast),
    # auto-sized class block (single grid step here).
    emb_bf16 = embedding.astype(jnp.bfloat16)
    out_bf16 = jax.block_until_ready(
        prompt_learner_forward(ctx1, ctx2, emb_bf16, name_lens))
    ref_bf16 = prompt_learner_reference(ctx1, ctx2, emb_bf16, name_lens)
    assert out_bf16.dtype == jnp.bfloat16
    assert jnp.allclose(out_bf16.astype(jnp.float32), ref_bf16.astype(jnp.float32)), \
        "Pallas output does not match reference (bf16 embedding)"

    # Check 3: bf16 + ragged tail (grid=4, last block 1 valid + 2 OOB classes).
    out_bf16_r = jax.block_until_ready(
        prompt_learner_forward(ctx1, ctx2, emb_bf16, name_lens, block_classes=3))
    assert jnp.allclose(out_bf16_r.astype(jnp.float32), ref_bf16.astype(jnp.float32)), \
        "Pallas output does not match reference (bf16, ragged class tail)"

    print("KERNEL_OK")
</pallas_src>

<mosaic_0001>
module attributes {stable_mosaic.version = 11 : i64} {
  func.func @_prompt_kernel(%arg0: i32, %arg1: memref<12xi32, #tpu.memory_space<smem>>, %arg2: memref<2x128xf32, #tpu.memory_space<vmem>>, %arg3: memref<2x128xf32, #tpu.memory_space<vmem>>, %arg4: memref<4x16x128xf32, #tpu.memory_space<vmem>>, %arg5: memref<4x16x128xf32, #tpu.memory_space<vmem>>) attributes {dimension_semantics = [#tpu.dimension_semantics<parallel>], iteration_bounds = array<i64: 3>, scalar_prefetch = 1 : i64, scratch_operands = 0 : i64, tpu.core_type = #tpu.core_type<tc>, window_params = [{pipeline_mode = #tpu.pipeline_mode<synchronous>, transform_indices = @transform_0, window_bounds = array<i64: 2, 128>}, {pipeline_mode = #tpu.pipeline_mode<synchronous>, transform_indices = @transform_1, window_bounds = array<i64: 2, 128>}, {transform_indices = @transform_2, window_bounds = array<i64: 4, 16, 128>}, {transform_indices = @transform_3, window_bounds = array<i64: 4, 16, 128>}]} {
    %c4_i32 = arith.constant 4 : i32
    %0 = arith.muli %arg0, %c4_i32 : i32
    %c0 = arith.constant 0 : index
    %c0_0 = arith.constant 0 : index
    %c0_1 = arith.constant 0 : index
    %1 = vector.load %arg4[%c0, %c0_0, %c0_1] : memref<4x16x128xf32, #tpu.memory_space<vmem>>, vector<4x16x128xf32>
    %c0_2 = arith.constant 0 : index
    %c0_3 = arith.constant 0 : index
    %c0_4 = arith.constant 0 : index
    %2 = vector.load %arg5[%c0_2, %c0_3, %c0_4] : memref<4x16x128xf32, #tpu.memory_space<vmem>>, vector<4x16x128xf32>
    tpu.vector_store %arg5[%c0_2, %c0_3, %c0_4], %1 {strides = array<i32>} : memref<4x16x128xf32, #tpu.memory_space<vmem>>, vector<4x16x128xf32>,
    %c0_5 = arith.constant 0 : index
    %c0_6 = arith.constant 0 : index
    %3 = vector.load %arg2[%c0_5, %c0_6] : memref<2x128xf32, #tpu.memory_space<vmem>>, vector<2x128xf32>
    %4 = vector.shape_cast %3 : vector<2x128xf32> to vector<1x2x128xf32>
    %5 = vector.shape_cast %4 : vector<1x2x128xf32> to vector<1x2x128xf32>
    %6 = vector.broadcast %5 : vector<1x2x128xf32> to vector<4x2x128xf32>
    %c0_7 = arith.constant 0 : index
    %c1 = arith.constant 1 : index
    %c0_8 = arith.constant 0 : index
    %7 = vector.load %arg5[%c0_7, %c1, %c0_8] : memref<4x16x128xf32, #tpu.memory_space<vmem>>, vector<4x2x128xf32>
    tpu.vector_store %arg5[%c0_7, %c1, %c0_8], %6 {strides = array<i32>} : memref<4x16x128xf32, #tpu.memory_space<vmem>>, vector<4x2x128xf32>,
    %c0_9 = arith.constant 0 : index
    %c0_10 = arith.constant 0 : index
    %8 = vector.load %arg3[%c0_9, %c0_10] : memref<2x128xf32, #tpu.memory_space<vmem>>, vector<2x128xf32>
    %9 = vector.shape_cast %8 : vector<2x128xf32> to vector<1x2x128xf32>
    %c0_i32 = arith.constant 0 : i32
    %10 = arith.addi %0, %c0_i32 : i32
    %11 = arith.index_cast %10 : i32 to index
    %12 = memref.load %arg1[%11] : memref<12xi32, #tpu.memory_space<smem>>
    %c3_i32 = arith.constant 3 : i32
    %13 = arith.addi %c3_i32, %12 : i32
    %14 = arith.index_cast %c0_i32 : i32 to index
    %15 = arith.index_cast %13 : i32 to index
    %c0_11 = arith.constant 0 : index
    %16 = vector.load %arg5[%14, %15, %c0_11] : memref<4x16x128xf32, #tpu.memory_space<vmem>>, vector<1x2x128xf32>
    tpu.vector_store %arg5[%14, %15, %c0_11], %9 {strides = array<i32>} : memref<4x16x128xf32, #tpu.memory_space<vmem>>, vector<1x2x128xf32>,
    %c1_i32 = arith.constant 1 : i32
    %17 = arith.addi %0, %c1_i32 : i32
    %18 = arith.index_cast %17 : i32 to index
    %19 = memref.load %arg1[%18] : memref<12xi32, #tpu.memory_space<smem>>
    %c3_i32_12 = arith.constant 3 : i32
    %20 = arith.addi %c3_i32_12, %19 : i32
    %21 = arith.index_cast %c1_i32 : i32 to index
    %22 = arith.index_cast %20 : i32 to index
    %c0_13 = arith.constant 0 : index
    %23 = vector.load %arg5[%21, %22, %c0_13] : memref<4x16x128xf32, #tpu.memory_space<vmem>>, vector<1x2x128xf32>
    tpu.vector_store %arg5[%21, %22, %c0_13], %9 {strides = array<i32>} : memref<4x16x128xf32, #tpu.memory_space<vmem>>, vector<1x2x128xf32>,
    %c2_i32 = arith.constant 2 : i32
    %24 = arith.addi %0, %c2_i32 : i32
    %25 = arith.index_cast %24 : i32 to index
    %26 = memref.load %arg1[%25] : memref<12xi32, #tpu.memory_space<smem>>
    %c3_i32_14 = arith.constant 3 : i32
    %27 = arith.addi %c3_i32_14, %26 : i32
    %28 = arith.index_cast %c2_i32 : i32 to index
    %29 = arith.index_cast %27 : i32 to index
    %c0_15 = arith.constant 0 : index
    %30 = vector.load %arg5[%28, %29, %c0_15] : memref<4x16x128xf32, #tpu.memory_space<vmem>>, vector<1x2x128xf32>
    tpu.vector_store %arg5[%28, %29, %c0_15], %9 {strides = array<i32>} : memref<4x16x128xf32, #tpu.memory_space<vmem>>, vector<1x2x128xf32>,
    %c3_i32_16 = arith.constant 3 : i32
    %31 = arith.addi %0, %c3_i32_16 : i32
    %32 = arith.index_cast %31 : i32 to index
    %33 = memref.load %arg1[%32] : memref<12xi32, #tpu.memory_space<smem>>
    %c3_i32_17 = arith.constant 3 : i32
    %34 = arith.addi %c3_i32_17, %33 : i32
    %35 = arith.index_cast %c3_i32_16 : i32 to index
    %36 = arith.index_cast %34 : i32 to index
    %c0_18 = arith.constant 0 : index
    %37 = vector.load %arg5[%35, %36, %c0_18] : memref<4x16x128xf32, #tpu.memory_space<vmem>>, vector<1x2x128xf32>
    tpu.vector_store %arg5[%35, %36, %c0_18], %9 {strides = array<i32>} : memref<4x16x128xf32, #tpu.memory_space<vmem>>, vector<1x2x128xf32>,
    %c4_i32_19 = arith.constant 4 : i32
    return
  }
  func.func @transform_0(%arg0: i32, %arg1: memref<12xi32, #tpu.memory_space<smem>>) -> (i32, i32) {
    %c0_i32 = arith.constant 0 : i32
    %c0_i32_0 = arith.constant 0 : i32
    %c0_i32_1 = arith.constant 0 : i32
    return %c0_i32, %c0_i32_0 : i32, i32
  }
  func.func @transform_1(%arg0: i32, %arg1: memref<12xi32, #tpu.memory_space<smem>>) -> (i32, i32) {
    %c0_i32 = arith.constant 0 : i32
    %c0_i32_0 = arith.constant 0 : i32
    %c0_i32_1 = arith.constant 0 : i32
    return %c0_i32, %c0_i32_0 : i32, i32
  }
  func.func @transform_2(%arg0: i32, %arg1: memref<12xi32, #tpu.memory_space<smem>>) -> (i32, i32, i32) {
    %c0_i32 = arith.constant 0 : i32
    %c0_i32_0 = arith.constant 0 : i32
    %c0_i32_1 = arith.constant 0 : i32
    return %arg0, %c0_i32, %c0_i32_0 : i32, i32, i32
  }
  func.func @transform_3(%arg0: i32, %arg1: memref<12xi32, #tpu.memory_space<smem>>) -> (i32, i32, i32) {
    %c0_i32 = arith.constant 0 : i32
    %c0_i32_0 = arith.constant 0 : i32
    %c0_i32_1 = arith.constant 0 : i32
    return %arg0, %c0_i32, %c0_i32_0 : i32, i32, i32
  }
}

</mosaic_0001>

<llo_original>
// kernel: tpu_custom_call.1
$region0: #{tpu_custom_call.1}
  #allocation0 [shape = 'u32[]', space=smem, size = 0x4, offset = 0x4, fixed_abs, tag = 'smem constant byte address 0x4 - core index']
  #allocation1 [shape = 'u32[72,128]{1,0:T(1,128)}', space=vmem, size = 0x9000, scoped, tag = 'internal scratch']
  #allocation2 [shape = 's32[1]{0}', space=sflag, size = 0x4, scoped, tag = 'scoped memory for tpu_custom_call.1']
  #allocation3 [shape = 'u8[512]{0}', space=smem, size = 0x200, scoped, tag = 'prefetched SMEM operand 0']
  %s0 = inlined_call_operand.hbm [shape: s32[12], index: 0, kind: input, shape index: {}]
  %s1 = inlined_call_operand.hbm [shape: f32[2,128], index: 1, kind: input, shape index: {}]
  %s2 = inlined_call_operand.hbm [shape: f32[2,128], index: 2, kind: input, shape index: {}]
  %s3 = inlined_call_operand.hbm [shape: f32[10,16,128], index: 3, kind: input, shape index: {}]
  %s4 = inlined_call_operand.hbm [shape: f32[10,16,128], index: 4, kind: output, shape index: {}]
  %s5 = sld [smem:[#allocation0]]
  $region57: #{tpu_custom_call.1} parent=0
    _
  %s7 = ssub.s32 1, %s5
  %s8 = scalar_select 0, %s7, %s5
  %s10 = sshll.u32 %s0, 4
  %s11 = int_to_ptr.hbm [resolvable:$true] %s10
  %13 = dma.hbm_to_smem %s11, 16, [#allocation3], [#allocation2]
  %15 = dma.done [#allocation2], 16
  %16 = sfence
  $region1: #{tpu_custom_call.1} parent=0
    #allocation4 [shape = 'u8[1024]{0}', space=vmem, size = 0x400, scoped, tag = 'input window, operand 1, single buffered']
    #allocation5 [shape = 's32[2]{0}', space=sflag, size = 0x8, scoped, tag = 'scoped memory for tpu_custom_call.1']
    #allocation6 [shape = 's32[2]{0}', space=sflag, size = 0x8, scoped, tag = 'scoped memory for tpu_custom_call.1']
    #allocation7 [shape = 'u8[1024]{0}', space=vmem, size = 0x400, scoped, tag = 'input window, operand 2, single buffered']
    #allocation8 [shape = 's32[1]{0}', space=sflag, size = 0x4, scoped, tag = 'scoped memory for tpu_custom_call.1']
    #allocation9 [shape = 'u8[65536]{0}', space=vmem, size = 0x10000, scoped, tag = 'input window, operand 3']
    #allocation10 [shape = 'u8[65536]{0}', space=vmem, size = 0x10000, scoped, tag = 'output window, operand 0']
    %17 = vsyncpa [#allocation5], 0
    %18 = vsyncpa [#allocation8], 0
    %19 = vsyncpa [#allocation6], 0
    %s20 = scalar_lea.sflag [#allocation6], 1
    %21 = vsyncpa %s20, 0
    loop: start=0, step=1, limit=5
    $region2: #{tpu_custom_call.1} parent=1 // loop_pre_header
      _
    $region3: #{tpu_custom_call.1} parent=1 // loop_header
      %s23 = sphi 0, %s27
      %p24 = scmp.ge.s32.totalorder %s23, 5
      %s31 = sphi 0, %s31
      %s33 = sphi 0, %s31
      %s34 = sphi 0, %s33
      %s48 = sphi 0, %s34
      %s52 = sphi 0, %s52
      %s54 = sphi 0, %s52
      %s55 = sphi 0, %s54
      %s69 = sphi 0, %s55
      %s75 = sphi 0, %s77
      %s78 = sphi 0, %s75
      %s79 = sphi 0, %s78
      %s95 = sphi 0, %s79
      %s101 = sphi 0, %s103
      %s104 = sphi 0, %s101
      %s105 = sphi 0, %s104
      %s121 = sphi 0, %s105
    $region4: #{tpu_custom_call.1} parent=1 // loop_header_branch
      %26 = sbr.rel (%p24) target = $region8
    $region5: #{tpu_custom_call.1} parent=1 // loop_body
      %s28 = ssub.s32 %s23, 1
      %s29 = ssub.s32 %s23, 2
      %s30 = sadd.s32 %s23, 1
      %s32 = sadd.s32 %s31, 1
      %p35 = scmp.eq.s32.totalorder %s23, 2
      %p36 = scmp.ne.s32.totalorder %s31, %s33
      %p37 = scmp.eq.s32.totalorder %s23, 0
      %p38 = por %p36, %p37
      %p39 = scmp.ne.s32.totalorder %s31, %s33
      %p40 = scmp.eq.s32.totalorder %s28, 2
      %p41 = por %p39, %p40
      %p42 = scmp.ne.s32.totalorder %s33, %s34
      %p43 = scmp.eq.s32.totalorder %s28, 0
      %p44 = por %p42, %p43
      %p45 = scmp.ne.s32.totalorder %s33, %s34
      %p46 = scmp.eq.s32.totalorder %s29, 2
      %p47 = por %p45, %p46
      %p49 = scmp.ne.s32.totalorder %s34, %s48
      %p50 = scmp.eq.s32.totalorder %s29, 0
      %p51 = por %p49, %p50
      %s53 = sadd.s32 %s52, 1
      %p56 = scmp.eq.s32.totalorder %s23, 2
      %p57 = scmp.ne.s32.totalorder %s52, %s54
      %p58 = scmp.eq.s32.totalorder %s23, 0
      %p59 = por %p57, %p58
      %p60 = scmp.ne.s32.totalorder %s52, %s54
      %p61 = scmp.eq.s32.totalorder %s28, 2
      %p62 = por %p60, %p61
      %p63 = scmp.ne.s32.totalorder %s54, %s55
      %p64 = scmp.eq.s32.totalorder %s28, 0
      %p65 = por %p63, %p64
      %p66 = scmp.ne.s32.totalorder %s54, %s55
      %p67 = scmp.eq.s32.totalorder %s29, 2
      %p68 = por %p66, %p67
      %p70 = scmp.ne.s32.totalorder %s55, %s69
      %p71 = scmp.eq.s32.totalorder %s29, 0
      %p72 = por %p70, %p71
      %s73 = ssub.s32 %s23, %s30
      %p74 = scmp.eq.s32.totalorder %s73, 0
      %s76 = sadd.s32 %s75, 1
      %s77 = scalar_select %p74, %s75, %s76
      %p80 = pneg %p74
      %p81 = scmp.eq.s32.totalorder %s23, 2
      %p82 = por %p80, %p81
      %p83 = scmp.ne.s32.totalorder %s75, %s78
      %p84 = scmp.eq.s32.totalorder %s23, 0
      %p85 = por %p83, %p84
      %p86 = scmp.ne.s32.totalorder %s75, %s78
      %p87 = scmp.eq.s32.totalorder %s28, 2
      %p88 = por %p86, %p87
      %p89 = scmp.ne.s32.totalorder %s78, %s79
      %p90 = scmp.eq.s32.totalorder %s28, 0
      %p91 = por %p89, %p90
      %p92 = scmp.ne.s32.totalorder %s78, %s79
      %p93 = scmp.eq.s32.totalorder %s29, 2
      %p94 = por %p92, %p93
      %p96 = scmp.ne.s32.totalorder %s79, %s95
      %p97 = scmp.eq.s32.totalorder %s29, 0
      %p98 = por %p96, %p97
      %s99 = ssub.s32 %s23, %s30
      %p100 = scmp.eq.s32.totalorder %s99, 0
      %s102 = sadd.s32 %s101, 1
      %s103 = scalar_select %p100, %s101, %s102
      %p106 = pneg %p100
      %p107 = scmp.eq.s32.totalorder %s23, 2
      %p108 = por %p106, %p107
      %p109 = scmp.ne.s32.totalorder %s101, %s104
      %p110 = scmp.eq.s32.totalorder %s23, 0
      %p111 = por %p109, %p110
      %p112 = scmp.ne.s32.totalorder %s101, %s104
      %p113 = scmp.eq.s32.totalorder %s28, 2
      %p114 = por %p112, %p113
      %p115 = scmp.ne.s32.totalorder %s104, %s105
      %p116 = scmp.eq.s32.totalorder %s28, 0
      %p117 = por %p115, %p116
      %p118 = scmp.ne.s32.totalorder %s104, %s105
      %p119 = scmp.eq.s32.totalorder %s29, 2
      %p120 = por %p118, %p119
      %p122 = scmp.ne.s32.totalorder %s105, %s121
      %p123 = scmp.eq.s32.totalorder %s29, 0
      %p124 = por %p122, %p123
      %p125 = scmp.le.s32.totalorder 1, %s23
      %p126 = scmp.lt.s32.totalorder %s23, 4
      %p127 = pnand %p125, %p126
      %p128 = pneg %p127
      // Predicated region
      $region9: #{tpu_custom_call.1} parent=5 // pred_check
        _
      $region10: #{tpu_custom_call.1} parent=5 // pred_check_branch
        %130 = sbr.rel (%p127) target = $region12
      $region11: #{tpu_custom_call.1} parent=5 // pred_region
        %s131 = ssub.s32 %s23, 1
        // Predicated region
        $region13: #{tpu_custom_call.1} parent=11 // pred_check
          %p132 = pneg %p44
        $region14: #{tpu_custom_call.1} parent=11 // pred_check_branch
          %134 = sbr.rel (%p132) target = $region16
        $region15: #{tpu_custom_call.1} parent=11 // pred_region
          %136 = vsyncadd [#allocation5], 0
          %s138 = sshll.u32 %s1, 4
          %s139 = int_to_ptr.hbm [resolvable:$true] %s138
          %s140 = sshll.u32 [#allocation4], 4
          %s141 = int_to_ptr.vmem [resolvable:$true] %s140
          %143 = dma.hbm_to_vmem [thread:$0]  %s139, 32, %s141, [#allocation5]
        $region16: #{tpu_custom_call.1} parent=11 // pred_fallthru
          _
        // Predicated region
        $region17: #{tpu_custom_call.1} parent=11 // pred_check
          %p144 = pneg %p65
        $region18: #{tpu_custom_call.1} parent=11 // pred_check_branch
          %146 = sbr.rel (%p144) target = $region20
        $region19: #{tpu_custom_call.1} parent=11 // pred_region
          %148 = vsyncadd [#allocation8], 0
          %s150 = sshll.u32 %s2, 4
          %s151 = int_to_ptr.hbm [resolvable:$true] %s150
          %s152 = sshll.u32 [#allocation7], 4
          %s153 = int_to_ptr.vmem [resolvable:$true] %s152
          %155 = dma.hbm_to_vmem [thread:$0]  %s151, 32, %s153, [#allocation8]
        $region20: #{tpu_custom_call.1} parent=11 // pred_fallthru
          _
      $region12: #{tpu_custom_call.1} parent=5 // pred_fallthru
        _
      %p156 = scmp.lt.s32.totalorder %s23, 3
      // Predicated region
      $region21: #{tpu_custom_call.1} parent=5 // pred_check
        %p157 = pneg %p156
      $region22: #{tpu_custom_call.1} parent=5 // pred_check_branch
        %159 = sbr.rel (%p157) target = $region24
      $region23: #{tpu_custom_call.1} parent=5 // pred_region
        // Predicated region
        $region25: #{tpu_custom_call.1} parent=23 // pred_check
          %p160 = pneg %p85
        $region26: #{tpu_custom_call.1} parent=23 // pred_check_branch
          %162 = sbr.rel (%p160) target = $region28
        $region27: #{tpu_custom_call.1} parent=23 // pred_region
          %s163 = sand.u32 %s23, 1
          %s164 = scalar_lea.sflag [#allocation5], %s163
          %s165 = sand.u32 %s75, 1
          %s166 = smul.addr %s165, 64
          %s167 = scalar_lea.vmem [#allocation9], %s166
          %s168 = smul.u32 4, %s23
          %s169 = ssub.s32 10, %s168
          %p170 = scmp.lt.s32.totalorder %s169, 4
          %s171 = scalar_select %p170, %s169, 4
          %s172 = smul.u32 8, %s171
          %s173 = smul.u32 %s172, 2
          %s174 = ssub.s32 64, %s173
          %s175 = sshll.u32 %s174, 4
          %176 = vsyncadd %s164, %s175
          %p177 = scmp.ne.s32.totalorder 0, %s173
          %s178 = smul.addr %s168, 2
          %s179 = smul.addr %s178, 8
          %s180 = scalar_lea.hbm %s3, %s179
          %s181 = smul.u32 %s171, 2
          %s182 = smul.u32 8, %s181
          %s183 = sshll.u32 %s180, 4
          %s184 = int_to_ptr.hbm [resolvable:$true] %s183
          %s185 = sshll.u32 %s167, 4
          %s186 = int_to_ptr.vmem [resolvable:$true] %s185
          %s187 = sshll.u32 %s182, 4
          %191 = dma.hbm_to_vmem [thread:$0]  (%p177), %s184, %s187, %s186, %s164, 128, 128, 8
        $region28: #{tpu_custom_call.1} parent=23 // pred_fallthru
          _
      $region24: #{tpu_custom_call.1} parent=5 // pred_fallthru
        _
      %p192 = scmp.le.s32.totalorder 1, %s23
      %p193 = scmp.lt.s32.totalorder %s23, 4
      %p194 = pnand %p192, %p193
      %p195 = pneg %p194
      // Predicated region
      $region29: #{tpu_custom_call.1} parent=5 // pred_check
        _
      $region30: #{tpu_custom_call.1} parent=5 // pred_check_branch
        %197 = sbr.rel (%p194) target = $region32
      $region31: #{tpu_custom_call.1} parent=5 // pred_region
        %s198 = ssub.s32 %s23, 1
        // Predicated region
        $region33: #{tpu_custom_call.1} parent=31 // pred_check
          %p199 = pneg %p44
        $region34: #{tpu_custom_call.1} parent=31 // pred_check_branch
          %201 = sbr.rel (%p199) target = $region36
        $region35: #{tpu_custom_call.1} parent=31 // pred_region
          %203 = dma.done [#allocation5], 32
        $region36: #{tpu_custom_call.1} parent=31 // pred_fallthru
          _
        // Predicated region
        $region37: #{tpu_custom_call.1} parent=31 // pred_check
          %p204 = pneg %p65
        $region38: #{tpu_custom_call.1} parent=31 // pred_check_branch
          %206 = sbr.rel (%p204) target = $region40
        $region39: #{tpu_custom_call.1} parent=31 // pred_region
          %208 = dma.done [#allocation8], 32
        $region40: #{tpu_custom_call.1} parent=31 // pred_fallthru
          _
        %s209 = sand.u32 %s28, 1
        %s210 = scalar_lea.sflag [#allocation5], %s209
        %s211 = sand.u32 %s78, 1
        %s212 = smul.addr %s211, 64
        %s213 = scalar_lea.vmem [#allocation9], %s212
        // Predicated region
        $region41: #{tpu_custom_call.1} parent=31 // pred_check
          %p214 = pneg %p91
        $region42: #{tpu_custom_call.1} parent=31 // pred_check_branch
          %216 = sbr.rel (%p214) target = $region44
        $region43: #{tpu_custom_call.1} parent=31 // pred_region
          %218 = dma.done %s210, 1024
        $region44: #{tpu_custom_call.1} parent=31 // pred_fallthru
          _
        %p219 = pneg %p44
        %p220 = pneg %p41
        %p221 = pneg %p65
        %p222 = pneg %p62
        %s223 = sand.u32 %s28, 1
        %s224 = scalar_lea.sflag [#allocation5], %s223
        %s225 = sand.u32 %s78, 1
        %s226 = smul.addr %s225, 64
        %s227 = scalar_lea.vmem [#allocation9], %s226
        %p228 = pneg %p91
        %p229 = pneg %p88
        %p230 = pneg %p117
        %p231 = pneg %p114
        %s232 = sand.u32 %s104, 1
        %s233 = scalar_lea.sflag [#allocation6], %s232
        %s234 = sand.u32 %s104, 1
        %s235 = smul.addr %s234, 64
        %s236 = scalar_lea.vmem [#allocation10], %s235
        %s237 = smul.u32 4, %s28
        %s238 = ssub.s32 10, %s237
        %p239 = scmp.lt.s32.totalorder %s238, 4
        %s240 = scalar_select %p239, %s238, 4
        %s241 = smul.u32 8, %s240
        %s242 = smul.u32 %s241, 2
        %s243 = smul.u32 4, %s28
        %s244 = ssub.s32 10, %s243
        %p245 = scmp.lt.s32.totalorder %s244, 4
        %s246 = scalar_select %p245, %s244, 4
        %s247 = smul.u32 8, %s246
        %s248 = smul.u32 %s247, 2
        %s249 = smul.u32 %s28, 4
        %v250 = vld [vmem:[%s213] sm:$0xff]
        %v251 = vld [vmem:[%s213 + $0x8] sm:$0xff]
        %v252 = vld [vmem:[%s213 + $0x10] sm:$0xff]
        %v253 = vld [vmem:[%s213 + $0x18] sm:$0xff]
        %v254 = vld [vmem:[%s213 + $0x20] sm:$0xff]
        %v255 = vld [vmem:[%s213 + $0x28] sm:$0xff]
        %v256 = vld [vmem:[%s213 + $0x30] sm:$0xff]
        %v257 = vld [vmem:[%s213 + $0x38] sm:$0xff]
        %258 = vst [vmem:[%s236] sm:$0xff] %v250
        %259 = vst [vmem:[%s236 + $0x8] sm:$0xff] %v251
        %260 = vst [vmem:[%s236 + $0x10] sm:$0xff] %v252
        %261 = vst [vmem:[%s236 + $0x18] sm:$0xff] %v253
        %262 = vst [vmem:[%s236 + $0x20] sm:$0xff] %v254
        %263 = vst [vmem:[%s236 + $0x28] sm:$0xff] %v255
        %264 = vst [vmem:[%s236 + $0x30] sm:$0xff] %v256
        %265 = vst [vmem:[%s236 + $0x38] sm:$0xff] %v257
        %v266 = vld [vmem:[#allocation4] sm:$0x3]
        %267 = vst [vmem:[%s236 + $0x1] sm:$0x3] %v266
        %268 = vst [vmem:[%s236 + $0x11] sm:$0x3] %v266
        %269 = vst [vmem:[%s236 + $0x21] sm:$0x3] %v266
        %270 = vst [vmem:[%s236 + $0x31] sm:$0x3] %v266
        %v271 = vld [vmem:[#allocation7] sm:$0x3]
        %s272 = sld [smem:[#allocation3 + %s249]]
        %s273 = sadd.s32 %s272, 3
        %s274 = scalar_lea.vmem %s236, %s273 [#allocation10]
        %275 = vst [vmem:[%s274] sm:$0x3] %v271
        %s276 = sadd.s32 %s249, 1
        %s277 = sld [smem:[#allocation3 + %s276]]
        %s278 = sadd.s32 %s277, 3
        %s279 = sadd.s32 %s278, 16
        %s280 = scalar_lea.vmem %s236, %s279 [#allocation10]
        %281 = vst [vmem:[%s280] sm:$0x3] %v271
        %s282 = sadd.s32 %s249, 2
        %s283 = sld [smem:[#allocation3 + %s282]]
        %s284 = sadd.s32 %s283, 3
        %s285 = sadd.s32 %s284, 32
        %s286 = scalar_lea.vmem %s236, %s285 [#allocation10]
        %287 = vst [vmem:[%s286] sm:$0x3] %v271
        %s288 = sadd.s32 %s249, 3
        %s289 = sld [smem:[#allocation3 + %s288]]
        %s290 = sadd.s32 %s289, 3
        %s291 = sadd.s32 %s290, 48
        %s292 = scalar_lea.vmem %s236, %s291 [#allocation10]
        %293 = vst [vmem:[%s292] sm:$0x3] %v271
        %s294 = sand.u32 %s104, 1
        %s295 = scalar_lea.sflag [#allocation6], %s294
        %s296 = sand.u32 %s104, 1
        %s297 = smul.addr %s296, 64
        %s298 = scalar_lea.vmem [#allocation10], %s297
        // Predicated region
        $region45: #{tpu_custom_call.1} parent=31 // pred_check
          %p299 = pneg %p114
        $region46: #{tpu_custom_call.1} parent=31 // pred_check_branch
          %301 = sbr.rel (%p299) target = $region48
        $region47: #{tpu_custom_call.1} parent=31 // pred_region
          %s302 = smul.u32 4, %s28
          %s303 = ssub.s32 10, %s302
          %p304 = scmp.lt.s32.totalorder %s303, 4
          %s305 = scalar_select %p304, %s303, 4
          %s306 = smul.u32 8, %s305
          %s307 = smul.u32 %s306, 2
          %s308 = ssub.s32 64, %s307
          %s309 = sshll.u32 %s308, 4
          %310 = vsyncadd %s295, %s309
          %p311 = scmp.ne.s32.totalorder 0, %s307
          %s312 = smul.addr %s302, 2
          %s313 = smul.addr %s312, 8
          %s314 = scalar_lea.hbm %s4, %s313
          %s315 = smul.u32 %s305, 2
          %s316 = smul.u32 8, %s315
          %s317 = sshll.u32 %s298, 4
          %s318 = int_to_ptr.vmem [resolvable:$true] %s317
          %s319 = sshll.u32 %s314, 4
          %s320 = int_to_ptr.hbm [resolvable:$true] %s319
          %s321 = sshll.u32 %s316, 4
          %325 = dma.vmem_to_hbm [thread:$0]  (%p311), %s318, %s321, %s320, %s295, 128, 128, 8
        $region48: #{tpu_custom_call.1} parent=31 // pred_fallthru
          _
      $region32: #{tpu_custom_call.1} parent=5 // pred_fallthru
        _
      %p326 = scmp.le.s32.totalorder 2, %s23
      // Predicated region
      $region49: #{tpu_custom_call.1} parent=5 // pred_check
        %p327 = pneg %p326
      $region50: #{tpu_custom_call.1} parent=5 // pred_check_branch
        %329 = sbr.rel (%p327) target = $region52
      $region51: #{tpu_custom_call.1} parent=5 // pred_region
        %s330 = ssub.s32 %s23, 2
        // Predicated region
        $region53: #{tpu_custom_call.1} parent=51 // pred_check
          %p331 = pneg %p120
        $region54: #{tpu_custom_call.1} parent=51 // pred_check_branch
          %333 = sbr.rel (%p331) target = $region56
        $region55: #{tpu_custom_call.1} parent=51 // pred_region
          %s334 = sand.u32 %s105, 1
          %s335 = scalar_lea.sflag [#allocation6], %s334
          %s336 = sand.u32 %s105, 1
          %s337 = smul.addr %s336, 64
          %s338 = scalar_lea.vmem [#allocation10], %s337
          %340 = dma.done %s335, 1024
        $region56: #{tpu_custom_call.1} parent=51 // pred_fallthru
          _
      $region52: #{tpu_custom_call.1} parent=5 // pred_fallthru
        _
    $region6: #{tpu_custom_call.1} parent=1 // loop_footer
      %s27 = sadd.s32 1, %s23
    $region7: #{tpu_custom_call.1} parent=1 // loop_footer_branch
      %22 = sbr.rel target = $region3
    $region8: #{tpu_custom_call.1} parent=1 // loop_exit
      _
    %341 = vsyncpa [#allocation5], 1
    %s342 = scalar_lea.sflag [#allocation5], 1
    %343 = vsyncpa %s342, 1
    %344 = vsyncpa [#allocation8], 1
    %345 = vsyncpa [#allocation6], 1
    %s346 = scalar_lea.sflag [#allocation6], 1
    %347 = vsyncpa %s346, 1

</llo_original>
